<compile_context>
chip_gen: v7x
topology: tpu7x:2x2x1
jax: 0.10.0
libtpu: 0.0.40
codegen_flags: <defaults>
</compile_context>

<pallas_src>
import jax
import jax.numpy as jnp
from jax.experimental import pallas as pl
from jax.experimental.pallas import tpu as pltpu


# ------------------------------- Pallas kernel ------------------------------

def _attn_gate_kernel(x_ref, s_ref, w1_ref, b1_ref, wc_ref, bc_ref,
                      o_ref, cat_ref):
    """Fused attention gate on one (batch, spatial-tile) block.

    x_ref : (Cin,  TL) bf16   gating input tile (spatial on lanes)
    s_ref : (Cout, TL) bf16   skip-connection tile
    w1    : (Cout, Cout+Cin) bf16  fused [Wskip | Wx] 1x1-conv weight (BN folded)
    b1    : (Cout, 1)  f32    fused BN shift (bskip + bx)
    wc    : (Cout, Cout) bf16 gate 1x1-conv weight
    bc    : (Cout, 1)  f32    gate conv bias
    o_ref : (Cout, TL) bf16   gate * skip
    cat   : (Cout+Cin, TL) bf16 VMEM scratch for the fused-matmul operand
    """
    cout = s_ref.shape[0]
    skip = s_ref[...]
    # Assemble [skip; x] once; a single MXU pass replaces two under-filled dots.
    cat_ref[:cout, :] = skip.astype(jnp.bfloat16)
    cat_ref[cout:, :] = x_ref[...].astype(jnp.bfloat16)

    z = jnp.dot(w1_ref[...], cat_ref[...],
                preferred_element_type=jnp.float32) + b1_ref[...]
    h = jnp.maximum(z, 0.0).astype(jnp.bfloat16)

    logits = jnp.dot(wc_ref[...], h,
                     preferred_element_type=jnp.float32) + bc_ref[...]
    # sigmoid via EUP exp + EUP approximate reciprocal (keeps VALU free).
    gate = pl.reciprocal(1.0 + jnp.exp(-logits), approx=True)

    o_ref[...] = (gate * skip.astype(jnp.float32)).astype(o_ref.dtype)


# --------------------------- tiling / VMEM budgeting -------------------------

def _physical_vmem_bytes():
    try:
        return int(pltpu.get_tpu_info().vmem_capacity_bytes)
    except Exception:
        pass
    try:
        kind = jax.devices()[0].device_kind.lower()
    except Exception:
        kind = ""
    if "v7" in kind:
        return 64 << 20           # v7x: 64 MiB per TensorCore
    return 128 << 20              # v5e / v6e


def _is_dual_tensorcore():
    try:
        return "v7" in jax.devices()[0].device_kind.lower()
    except Exception:
        return False


def _pick_lane_tile(hw, n_batch, cin, cout, in_bytes, out_bytes, vmem_budget):
    """Largest lane tile (multiple of 128) whose pipelined working set fits."""
    # Per-lane bytes: double-buffered x/skip/out tiles + single bf16 concat
    # scratch + headroom for ~4 f32 (Cout, TL) intermediates.
    per_lane = (2 * (cin * in_bytes + cout * in_bytes + cout * out_bytes)
                + 2 * (cin + cout)
                + 4 * 4 * cout)
    hw128 = ((hw + 127) // 128) * 128
    candidates = [t for t in (2048, 1024, 512, 256, 128) if t <= hw128] or [128]
    tl = candidates[-1]
    for t in candidates:
        if t * per_lane <= vmem_budget:
            tl = t
            break
    # v7x megacore: prefer an even total step count so both TCs stay busy.
    if _is_dual_tensorcore():
        while tl > 128 and (n_batch * ((hw + tl - 1) // tl)) % 2 == 1:
            tl //= 2
    return tl


# ---------------------------------- wrapper ----------------------------------

def utnet_attn_forward(params, x, skip):
    """UTNet_attn.forward(x, skip) -> gate * skip.  NCHW in, NCHW out."""
    N, Cin, H, W = x.shape
    Cout = skip.shape[1]
    HW = H * W
    out_dtype = skip.dtype

    phys = _physical_vmem_bytes()
    vmem_limit = min((phys * 3) // 4, 96 << 20)
    w_bytes = 2 * (params["w1"].size * 2 + params["wc"].size * 2
                   + params["b1"].size * 4 + params["bc"].size * 4)
    tile_budget = max(int(vmem_limit * 0.55) - w_bytes, 128 * 1024)

    tl = _pick_lane_tile(HW, N, Cin, Cout,
                         x.dtype.itemsize, jnp.dtype(out_dtype).itemsize,
                         tile_budget)
    HW_pad = ((HW + tl - 1) // tl) * tl

    x3 = x.reshape(N, Cin, HW)
    s3 = skip.reshape(N, Cout, HW)
    if HW_pad != HW:
        # Pad irregular resolutions so stores stay lane-dense / unmasked and the
        # tile never becomes the full (Cout, HW) plane.
        x3 = jnp.pad(x3, ((0, 0), (0, 0), (0, HW_pad - HW)))
        s3 = jnp.pad(s3, ((0, 0), (0, 0), (0, HW_pad - HW)))

    grid = (N, HW_pad // tl)

    out = pl.pallas_call(
        _attn_gate_kernel,
        out_shape=jax.ShapeDtypeStruct((N, Cout, HW_pad), out_dtype),
        grid=grid,
        in_specs=[
            pl.BlockSpec((None, Cin, tl), lambda n, s: (n, 0, s)),
            pl.BlockSpec((None, Cout, tl), lambda n, s: (n, 0, s)),
            pl.BlockSpec((Cout, Cout + Cin), lambda n, s: (0, 0)),
            pl.BlockSpec((Cout, 1), lambda n, s: (0, 0)),
            pl.BlockSpec((Cout, Cout), lambda n, s: (0, 0)),
            pl.BlockSpec((Cout, 1), lambda n, s: (0, 0)),
        ],
        out_specs=pl.BlockSpec((None, Cout, tl), lambda n, s: (n, 0, s)),
        scratch_shapes=[pltpu.VMEM((Cout + Cin, tl), jnp.bfloat16)],
        compiler_params=pltpu.CompilerParams(
            dimension_semantics=("parallel", "parallel"),
            vmem_limit_bytes=int(vmem_limit)),
    )(x3, s3, params["w1"], params["b1"], params["wc"], params["bc"])

    if HW_pad != HW:
        out = out[..., :HW]
    return out.reshape(N, Cout, H, W)


# ----------------------- parameters (deterministic init) --------------------
# Conv2d(k=1) + BatchNorm2d in eval mode folded into (w_folded, shift):
#   y = (gamma/sqrt(var+eps)) * (W@x + b - mean) + beta

def _conv1x1_bn_folded(key, cin, cout):
    kw, kb, kg, kbe, km, kv = jax.random.split(key, 6)
    w = jax.random.normal(kw, (cout, cin), jnp.float32) / jnp.sqrt(float(cin))
    b = 0.1 * jax.random.normal(kb, (cout,), jnp.float32)
    gamma = 1.0 + 0.1 * jax.random.normal(kg, (cout,), jnp.float32)
    beta = 0.1 * jax.random.normal(kbe, (cout,), jnp.float32)
    mean = 0.1 * jax.random.normal(km, (cout,), jnp.float32)
    var = 1.0 + 0.1 * jax.random.uniform(kv, (cout,), jnp.float32)
    scale = gamma * jax.lax.rsqrt(var + 1e-5)
    return w * scale[:, None], (b - mean) * scale + beta


def _conv1x1(key, cin, cout):
    kw, kb = jax.random.split(key)
    w = jax.random.normal(kw, (cout, cin), jnp.float32) / jnp.sqrt(float(cin))
    b = 0.1 * jax.random.normal(kb, (cout,), jnp.float32)
    return w, b


def init_params(key, in_c, out_c):
    k1, k2, k3 = jax.random.split(key, 3)
    wx, bx = _conv1x1_bn_folded(k1, in_c, out_c)   # self.Wx    (conv1x1 + BN)
    ws, bs = _conv1x1_bn_folded(k2, out_c, out_c)  # self.Wskip (conv1x1 + BN)
    wc, bc = _conv1x1(k3, out_c, out_c)            # self.conv  (conv1x1 + sigmoid)
    # Fuse the first two 1x1 convs into one matmul over [skip; x].
    w1 = jnp.concatenate([ws, wx], axis=1)         # (out_c, out_c + in_c)
    return {
        "w1": w1.astype(jnp.bfloat16),
        "b1": (bx + bs).reshape(out_c, 1),
        "wc": wc.astype(jnp.bfloat16),
        "bc": bc.reshape(out_c, 1),
    }


def ref_forward(params, x, skip):
    """Pure-JAX f32 reference (same bf16 weights, f32 math throughout)."""
    N, Cin, H, W = x.shape
    Cout = skip.shape[1]
    xf = x.astype(jnp.float32).reshape(N, Cin, H * W)
    sf = skip.astype(jnp.float32).reshape(N, Cout, H * W)
    w1 = params["w1"].astype(jnp.float32)
    ws, wx = w1[:, :Cout], w1[:, Cout:]
    z = (jnp.einsum("oc,nci->noi", ws, sf)
         + jnp.einsum("oc,nci->noi", wx, xf) + params["b1"][None])
    h = jnp.maximum(z, 0.0)
    g = jax.nn.sigmoid(
        jnp.einsum("oc,nci->noi", params["wc"].astype(jnp.float32), h)
        + params["bc"][None])
    return (g * sf).reshape(N, Cout, H, W)


# ---------------------------------- main -------------------------------------

if __name__ == "__main__":
    key = jax.random.PRNGKey(0)
    kp, kx, ks = jax.random.split(key, 3)

    N, IN_C, OUT_C, H, W = 2, 4, 32, 16, 16     # x: gating signal, skip: encoder feature
    params = init_params(kp, IN_C, OUT_C)
    # bf16 activation I/O end-to-end (the producing U-Net layer hands over bf16).
    x = jax.random.normal(kx, (N, IN_C, H, W), jnp.float32).astype(jnp.bfloat16)
    skip = jax.random.normal(ks, (N, OUT_C, H, W), jnp.float32).astype(jnp.bfloat16)

    fwd = jax.jit(utnet_attn_forward)
    y = jax.block_until_ready(fwd(params, x, skip))

    assert y.shape == (N, OUT_C, H, W), y.shape
    assert y.dtype == skip.dtype, y.dtype
    y32 = y.astype(jnp.float32)
    assert bool(jnp.all(jnp.isfinite(y32)))

    y_ref = ref_forward(params, x, skip)
    rel_err = float(jnp.max(jnp.abs(y32 - y_ref)) /
                    (jnp.max(jnp.abs(y_ref)) + 1e-6))
    assert rel_err < 3e-2, f"relative err {rel_err}"

    print("KERNEL_OK")
</pallas_src>

<mosaic_0001>
module attributes {stable_mosaic.version = 11 : i64} {
  func.func @_attn_gate_kernel(%arg0: i32, %arg1: i32, %arg2: memref<1x4x256xbf16, #tpu.memory_space<vmem>>, %arg3: memref<1x32x256xbf16, #tpu.memory_space<vmem>>, %arg4: memref<32x36xbf16, #tpu.memory_space<vmem>>, %arg5: memref<32x1xf32, #tpu.memory_space<vmem>>, %arg6: memref<32x32xbf16, #tpu.memory_space<vmem>>, %arg7: memref<32x1xf32, #tpu.memory_space<vmem>>, %arg8: memref<1x32x256xbf16, #tpu.memory_space<vmem>>, %arg9: memref<36x256xbf16, #tpu.memory_space<vmem>>) attributes {dimension_semantics = [#tpu.dimension_semantics<parallel>, #tpu.dimension_semantics<parallel>], iteration_bounds = array<i64: 2, 1>, scalar_prefetch = 0 : i64, scratch_operands = 1 : i64, tpu.core_type = #tpu.core_type<tc>, window_params = [{transform_indices = @transform_0, window_bounds = array<i64: 1, 4, 256>}, {transform_indices = @transform_1, window_bounds = array<i64: 1, 32, 256>}, {pipeline_mode = #tpu.pipeline_mode<synchronous>, transform_indices = @transform_2, window_bounds = array<i64: 32, 36>}, {pipeline_mode = #tpu.pipeline_mode<synchronous>, transform_indices = @transform_3, window_bounds = array<i64: 32, 1>}, {pipeline_mode = #tpu.pipeline_mode<synchronous>, transform_indices = @transform_4, window_bounds = array<i64: 32, 32>}, {pipeline_mode = #tpu.pipeline_mode<synchronous>, transform_indices = @transform_5, window_bounds = array<i64: 32, 1>}, {transform_indices = @transform_6, window_bounds = array<i64: 1, 32, 256>}]} {
    %c0 = arith.constant 0 : index
    %c0_0 = arith.constant 0 : index
    %c0_1 = arith.constant 0 : index
    %0 = vector.load %arg3[%c0, %c0_0, %c0_1] : memref<1x32x256xbf16, #tpu.memory_space<vmem>>, vector<1x32x256xbf16>
    %1 = vector.shape_cast %0 : vector<1x32x256xbf16> to vector<32x256xbf16>
    %c0_2 = arith.constant 0 : index
    %c0_3 = arith.constant 0 : index
    %2 = vector.load %arg9[%c0_2, %c0_3] : memref<36x256xbf16, #tpu.memory_space<vmem>>, vector<32x256xbf16>
    tpu.vector_store %arg9[%c0_2, %c0_3], %1 {strides = array<i32>} : memref<36x256xbf16, #tpu.memory_space<vmem>>, vector<32x256xbf16>,
    %c0_4 = arith.constant 0 : index
    %c0_5 = arith.constant 0 : index
    %c0_6 = arith.constant 0 : index
    %3 = vector.load %arg2[%c0_4, %c0_5, %c0_6] : memref<1x4x256xbf16, #tpu.memory_space<vmem>>, vector<1x4x256xbf16>
    %4 = vector.shape_cast %3 : vector<1x4x256xbf16> to vector<4x256xbf16>
    %c32 = arith.constant 32 : index
    %c0_7 = arith.constant 0 : index
    %5 = vector.load %arg9[%c32, %c0_7] : memref<36x256xbf16, #tpu.memory_space<vmem>>, vector<4x256xbf16>
    tpu.vector_store %arg9[%c32, %c0_7], %4 {strides = array<i32>} : memref<36x256xbf16, #tpu.memory_space<vmem>>, vector<4x256xbf16>,
    %c0_8 = arith.constant 0 : index
    %c0_9 = arith.constant 0 : index
    %6 = vector.load %arg4[%c0_8, %c0_9] : memref<32x36xbf16, #tpu.memory_space<vmem>>, vector<32x36xbf16>
    %c0_10 = arith.constant 0 : index
    %c0_11 = arith.constant 0 : index
    %7 = vector.load %arg9[%c0_10, %c0_11] : memref<36x256xbf16, #tpu.memory_space<vmem>>, vector<36x256xbf16>
    %cst = arith.constant dense<0.000000e+00> : vector<32x256xf32>
    %8 = tpu.matmul %6, %7, %cst {dimension_numbers = #tpu.dot_dimension_numbers<[1], [0], [0], [1], [0, 0, 1, 1], [], []>} : vector<32x36xbf16>, vector<36x256xbf16>, vector<32x256xf32> -> vector<32x256xf32>
    %c0_12 = arith.constant 0 : index
    %c0_13 = arith.constant 0 : index
    %9 = vector.load %arg5[%c0_12, %c0_13] : memref<32x1xf32, #tpu.memory_space<vmem>>, vector<32x1xf32>
    %10 = vector.broadcast %9 : vector<32x1xf32> to vector<32x256xf32>
    %11 = arith.addf %8, %10 : vector<32x256xf32>
    %cst_14 = arith.constant 0.000000e+00 : f32
    %12 = vector.broadcast %cst_14 : f32 to vector<32x256xf32>
    %13 = arith.maximumf %11, %12 : vector<32x256xf32>
    %14 = arith.truncf %13 : vector<32x256xf32> to vector<32x256xbf16>
    %c0_15 = arith.constant 0 : index
    %c0_16 = arith.constant 0 : index
    %15 = vector.load %arg6[%c0_15, %c0_16] : memref<32x32xbf16, #tpu.memory_space<vmem>>, vector<32x32xbf16>
    %cst_17 = arith.constant dense<0.000000e+00> : vector<32x256xf32>
    %16 = tpu.matmul %15, %14, %cst_17 {dimension_numbers = #tpu.dot_dimension_numbers<[1], [0], [0], [1], [0, 0, 1, 1], [], []>} : vector<32x32xbf16>, vector<32x256xbf16>, vector<32x256xf32> -> vector<32x256xf32>
    %c0_18 = arith.constant 0 : index
    %c0_19 = arith.constant 0 : index
    %17 = vector.load %arg7[%c0_18, %c0_19] : memref<32x1xf32, #tpu.memory_space<vmem>>, vector<32x1xf32>
    %18 = vector.broadcast %17 : vector<32x1xf32> to vector<32x256xf32>
    %19 = arith.addf %16, %18 : vector<32x256xf32>
    %cst_20 = arith.constant 0.000000e+00 : f32
    %20 = vector.broadcast %cst_20 : f32 to vector<32x256xf32>
    %21 = arith.subf %20, %19 : vector<32x256xf32>
    %22 = math.exp %21 : vector<32x256xf32>
    %cst_21 = arith.constant 1.000000e+00 : f32
    %23 = vector.broadcast %cst_21 : f32 to vector<32x256xf32>
    %24 = arith.addf %23, %22 : vector<32x256xf32>
    %25 = tpu.reciprocal %24 {approx = true} : vector<32x256xf32> -> vector<32x256xf32>
    %26 = arith.extf %1 : vector<32x256xbf16> to vector<32x256xf32>
    %27 = arith.mulf %25, %26 : vector<32x256xf32>
    %28 = arith.truncf %27 : vector<32x256xf32> to vector<32x256xbf16>
    %c0_22 = arith.constant 0 : index
    %c0_23 = arith.constant 0 : index
    %c0_24 = arith.constant 0 : index
    %29 = vector.load %arg8[%c0_22, %c0_23, %c0_24] : memref<1x32x256xbf16, #tpu.memory_space<vmem>>, vector<1x32x256xbf16>
    %30 = vector.shape_cast %29 : vector<1x32x256xbf16> to vector<32x256xbf16>
    %31 = vector.shape_cast %28 : vector<32x256xbf16> to vector<1x32x256xbf16>
    tpu.vector_store %arg8[%c0_22, %c0_23, %c0_24], %31 {strides = array<i32>} : memref<1x32x256xbf16, #tpu.memory_space<vmem>>, vector<1x32x256xbf16>,
    return
  }
  func.func @transform_0(%arg0: i32, %arg1: i32) -> (i32, i32, i32) {
    %c0_i32 = arith.constant 0 : i32
    %c0_i32_0 = arith.constant 0 : i32
    return %arg0, %c0_i32, %arg1 : i32, i32, i32
  }
  func.func @transform_1(%arg0: i32, %arg1: i32) -> (i32, i32, i32) {
    %c0_i32 = arith.constant 0 : i32
    %c0_i32_0 = arith.constant 0 : i32
    return %arg0, %c0_i32, %arg1 : i32, i32, i32
  }
  func.func @transform_2(%arg0: i32, %arg1: i32) -> (i32, i32) {
    %c0_i32 = arith.constant 0 : i32
    %c0_i32_0 = arith.constant 0 : i32
    %c0_i32_1 = arith.constant 0 : i32
    return %c0_i32, %c0_i32_0 : i32, i32
  }
  func.func @transform_3(%arg0: i32, %arg1: i32) -> (i32, i32) {
    %c0_i32 = arith.constant 0 : i32
    %c0_i32_0 = arith.constant 0 : i32
    %c0_i32_1 = arith.constant 0 : i32
    return %c0_i32, %c0_i32_0 : i32, i32
  }
  func.func @transform_4(%arg0: i32, %arg1: i32) -> (i32, i32) {
    %c0_i32 = arith.constant 0 : i32
    %c0_i32_0 = arith.constant 0 : i32
    %c0_i32_1 = arith.constant 0 : i32
    return %c0_i32, %c0_i32_0 : i32, i32
  }
  func.func @transform_5(%arg0: i32, %arg1: i32) -> (i32, i32) {
    %c0_i32 = arith.constant 0 : i32
    %c0_i32_0 = arith.constant 0 : i32
    %c0_i32_1 = arith.constant 0 : i32
    return %c0_i32, %c0_i32_0 : i32, i32
  }
  func.func @transform_6(%arg0: i32, %arg1: i32) -> (i32, i32, i32) {
    %c0_i32 = arith.constant 0 : i32
    %c0_i32_0 = arith.constant 0 : i32
    return %arg0, %c0_i32, %arg1 : i32, i32, i32
  }
}

</mosaic_0001>

<llo_original>
// kernel: utnet_attn_forward.1
$region0: #{utnet_attn_forward.1}
  #allocation0 [shape = 'u32[]', space=smem, size = 0x4, offset = 0x4, fixed_abs, tag = 'smem constant byte address 0x4 - core index']
  #allocation1 [shape = 'u32[144,128]{1,0:T(1,128)}', space=vmem, size = 0x12000, scoped, tag = 'internal scratch']
  #allocation2 [shape = 'bf16[36,256]{1,0:T(8,128)(2,1)}', space=vmem, size = 0x5000, scoped, tag = 'scratch operand']
  %s0 = inlined_call_operand.hbm [shape: bf16[2,4,256], index: 0, kind: input, shape index: {}]
  %s1 = inlined_call_operand.hbm [shape: bf16[2,32,256], index: 1, kind: input, shape index: {}]
  %s2 = inlined_call_operand.hbm [shape: bf16[32,36], index: 2, kind: input, shape index: {}]
  %s3 = inlined_call_operand.hbm [shape: f32[32,1], index: 3, kind: input, shape index: {}]
  %s4 = inlined_call_operand.hbm [shape: bf16[32,32], index: 4, kind: input, shape index: {}]
  %s5 = inlined_call_operand.hbm [shape: f32[32,1], index: 5, kind: input, shape index: {}]
  %s6 = inlined_call_operand.hbm [shape: bf16[2,32,256], index: 6, kind: output, shape index: {}]
  %s7 = sld [smem:[#allocation0]]
  $region81: #{utnet_attn_forward.1} parent=0
    _
  %s9 = ssub.s32 1, %s7
  %s10 = scalar_select 0, %s9, %s7
  $region1: #{utnet_attn_forward.1} parent=0
    #allocation3 [shape = 'u8[4096]{0}', space=vmem, size = 0x1000, scoped, tag = 'input window, operand 0']
    #allocation4 [shape = 's32[2]{0}', space=sflag, size = 0x8, scoped, tag = 'scoped memory for utnet_attn_forward.1']
    #allocation5 [shape = 's32[2]{0}', space=sflag, size = 0x8, scoped, tag = 'scoped memory for utnet_attn_forward.1']
    #allocation6 [shape = 'u8[32768]{0}', space=vmem, size = 0x8000, scoped, tag = 'input window, operand 1']
    #allocation7 [shape = 's32[2]{0}', space=sflag, size = 0x8, scoped, tag = 'scoped memory for utnet_attn_forward.1']
    #allocation8 [shape = 'u8[8192]{0}', space=vmem, size = 0x2000, scoped, tag = 'input window, operand 2, single buffered']
    #allocation9 [shape = 'u8[16384]{0}', space=vmem, size = 0x4000, scoped, tag = 'input window, operand 3, single buffered']
    #allocation10 [shape = 's32[1]{0}', space=sflag, size = 0x4, scoped, tag = 'scoped memory for utnet_attn_forward.1']
    #allocation11 [shape = 'u8[8192]{0}', space=vmem, size = 0x2000, scoped, tag = 'input window, operand 4, single buffered']
    #allocation12 [shape = 'u8[16384]{0}', space=vmem, size = 0x4000, scoped, tag = 'input window, operand 5, single buffered']
    #allocation13 [shape = 's32[1]{0}', space=sflag, size = 0x4, scoped, tag = 'scoped memory for utnet_attn_forward.1']
    #allocation14 [shape = 'u8[32768]{0}', space=vmem, size = 0x8000, scoped, tag = 'output window, operand 0']
    %11 = vsyncpa [#allocation4], 0
    %s12 = scalar_lea.sflag [#allocation4], 1
    %13 = vsyncpa %s12, 0
    %14 = vsyncpa [#allocation7], 0
    %s15 = scalar_lea.sflag [#allocation7], 1
    %16 = vsyncpa %s15, 0
    %17 = vsyncpa [#allocation10], 0
    %18 = vsyncpa [#allocation13], 0
    %19 = vsyncpa [#allocation5], 0
    %s20 = scalar_lea.sflag [#allocation5], 1
    %21 = vsyncpa %s20, 0
    loop: start=0, step=1, limit=4
    $region2: #{utnet_attn_forward.1} parent=1 // loop_pre_header
      _
    $region3: #{utnet_attn_forward.1} parent=1 // loop_header
      %s23 = sphi 0, %s27
      %p24 = scmp.ge.s32.totalorder %s23, 4
      %s30 = sphi 0, %s42
      %s31 = sphi 0, %s38
      %s32 = sphi 0, %s30
      %s33 = sphi 0, %s31
      %s34 = sphi 0, %s32
      %s35 = sphi 0, %s33
      %s47 = sphi 0, %s49
      %s50 = sphi 0, %s47
      %s51 = sphi 0, %s50
      %s67 = sphi 0, %s51
      %s75 = sphi 0, %s77
      %s78 = sphi 0, %s75
      %s79 = sphi 0, %s78
      %s95 = sphi 0, %s79
      %s99 = sphi 0, %s99
      %s101 = sphi 0, %s99
      %s102 = sphi 0, %s101
      %s116 = sphi 0, %s102
      %s120 = sphi 0, %s120
      %s122 = sphi 0, %s120
      %s123 = sphi 0, %s122
      %s137 = sphi 0, %s123
      %s141 = sphi 0, %s141
      %s143 = sphi 0, %s141
      %s144 = sphi 0, %s143
      %s158 = sphi 0, %s144
      %s162 = sphi 0, %s162
      %s164 = sphi 0, %s162
      %s165 = sphi 0, %s164
      %s179 = sphi 0, %s165
      %s187 = sphi 0, %s189
      %s190 = sphi 0, %s187
      %s191 = sphi 0, %s190
      %s207 = sphi 0, %s191
    $region4: #{utnet_attn_forward.1} parent=1 // loop_header_branch
      %26 = sbr.rel (%p24) target = $region8
    $region5: #{utnet_attn_forward.1} parent=1 // loop_body
      %s28 = ssub.s32 %s23, 1
      %s29 = ssub.s32 %s23, 2
      %s36 = sadd.s32 1, %s31
      %p37 = scmp.ge.s32.totalorder %s36, 1
      %s38 = scalar_select %p37, 0, %s36
      %s39 = sadd.s32 1, %s30
      %s40 = scalar_select %p37, %s39, %s30
      %p41 = scmp.ge.s32.totalorder %s40, 2
      %s42 = scalar_select %p41, 0, %s40
      %s43 = ssub.s32 %s30, %s42
      %s44 = ssub.s32 %s31, %s38
      %s45 = sor.u32 %s43, %s44
      %p46 = scmp.eq.s32.totalorder %s45, 0
      %s48 = sadd.s32 %s47, 1
      %s49 = scalar_select %p46, %s47, %s48
      %p52 = pneg %p46
      %p53 = scmp.eq.s32.totalorder %s23, 1
      %p54 = por %p52, %p53
      %p55 = scmp.ne.s32.totalorder %s47, %s50
      %p56 = scmp.eq.s32.totalorder %s23, 0
      %p57 = por %p55, %p56
      %p58 = scmp.ne.s32.totalorder %s47, %s50
      %p59 = scmp.eq.s32.totalorder %s28, 1
      %p60 = por %p58, %p59
      %p61 = scmp.ne.s32.totalorder %s50, %s51
      %p62 = scmp.eq.s32.totalorder %s28, 0
      %p63 = por %p61, %p62
      %p64 = scmp.ne.s32.totalorder %s50, %s51
      %p65 = scmp.eq.s32.totalorder %s29, 1
      %p66 = por %p64, %p65
      %p68 = scmp.ne.s32.totalorder %s51, %s67
      %p69 = scmp.eq.s32.totalorder %s29, 0
      %p70 = por %p68, %p69
      %s71 = ssub.s32 %s30, %s42
      %s72 = ssub.s32 %s31, %s38
      %s73 = sor.u32 %s71, %s72
      %p74 = scmp.eq.s32.totalorder %s73, 0
      %s76 = sadd.s32 %s75, 1
      %s77 = scalar_select %p74, %s75, %s76
      %p80 = pneg %p74
      %p81 = scmp.eq.s32.totalorder %s23, 1
      %p82 = por %p80, %p81
      %p83 = scmp.ne.s32.totalorder %s75, %s78
      %p84 = scmp.eq.s32.totalorder %s23, 0
      %p85 = por %p83, %p84
      %p86 = scmp.ne.s32.totalorder %s75, %s78
      %p87 = scmp.eq.s32.totalorder %s28, 1
      %p88 = por %p86, %p87
      %p89 = scmp.ne.s32.totalorder %s78, %s79
      %p90 = scmp.eq.s32.totalorder %s28, 0
      %p91 = por %p89, %p90
      %p92 = scmp.ne.s32.totalorder %s78, %s79
      %p93 = scmp.eq.s32.totalorder %s29, 1
      %p94 = por %p92, %p93
      %p96 = scmp.ne.s32.totalorder %s79, %s95
      %p97 = scmp.eq.s32.totalorder %s29, 0
      %p98 = por %p96, %p97
      %s100 = sadd.s32 %s99, 1
      %p103 = scmp.eq.s32.totalorder %s23, 1
      %p104 = scmp.ne.s32.totalorder %s99, %s101
      %p105 = scmp.eq.s32.totalorder %s23, 0
      %p106 = por %p104, %p105
      %p107 = scmp.ne.s32.totalorder %s99, %s101
      %p108 = scmp.eq.s32.totalorder %s28, 1
      %p109 = por %p107, %p108
      %p110 = scmp.ne.s32.totalorder %s101, %s102
      %p111 = scmp.eq.s32.totalorder %s28, 0
      %p112 = por %p110, %p111
      %p113 = scmp.ne.s32.totalorder %s101, %s102
      %p114 = scmp.eq.s32.totalorder %s29, 1
      %p115 = por %p113, %p114
      %p117 = scmp.ne.s32.totalorder %s102, %s116
      %p118 = scmp.eq.s32.totalorder %s29, 0
      %p119 = por %p117, %p118
      %s121 = sadd.s32 %s120, 1
      %p124 = scmp.eq.s32.totalorder %s23, 1
      %p125 = scmp.ne.s32.totalorder %s120, %s122
      %p126 = scmp.eq.s32.totalorder %s23, 0
      %p127 = por %p125, %p126
      %p128 = scmp.ne.s32.totalorder %s120, %s122
      %p129 = scmp.eq.s32.totalorder %s28, 1
      %p130 = por %p128, %p129
      %p131 = scmp.ne.s32.totalorder %s122, %s123
      %p132 = scmp.eq.s32.totalorder %s28, 0
      %p133 = por %p131, %p132
      %p134 = scmp.ne.s32.totalorder %s122, %s123
      %p135 = scmp.eq.s32.totalorder %s29, 1
      %p136 = por %p134, %p135
      %p138 = scmp.ne.s32.totalorder %s123, %s137
      %p139 = scmp.eq.s32.totalorder %s29, 0
      %p140 = por %p138, %p139
      %s142 = sadd.s32 %s141, 1
      %p145 = scmp.eq.s32.totalorder %s23, 1
      %p146 = scmp.ne.s32.totalorder %s141, %s143
      %p147 = scmp.eq.s32.totalorder %s23, 0
      %p148 = por %p146, %p147
      %p149 = scmp.ne.s32.totalorder %s141, %s143
      %p150 = scmp.eq.s32.totalorder %s28, 1
      %p151 = por %p149, %p150
      %p152 = scmp.ne.s32.totalorder %s143, %s144
      %p153 = scmp.eq.s32.totalorder %s28, 0
      %p154 = por %p152, %p153
      %p155 = scmp.ne.s32.totalorder %s143, %s144
      %p156 = scmp.eq.s32.totalorder %s29, 1
      %p157 = por %p155, %p156
      %p159 = scmp.ne.s32.totalorder %s144, %s158
      %p160 = scmp.eq.s32.totalorder %s29, 0
      %p161 = por %p159, %p160
      %s163 = sadd.s32 %s162, 1
      %p166 = scmp.eq.s32.totalorder %s23, 1
      %p167 = scmp.ne.s32.totalorder %s162, %s164
      %p168 = scmp.eq.s32.totalorder %s23, 0
      %p169 = por %p167, %p168
      %p170 = scmp.ne.s32.totalorder %s162, %s164
      %p171 = scmp.eq.s32.totalorder %s28, 1
      %p172 = por %p170, %p171
      %p173 = scmp.ne.s32.totalorder %s164, %s165
      %p174 = scmp.eq.s32.totalorder %s28, 0
      %p175 = por %p173, %p174
      %p176 = scmp.ne.s32.totalorder %s164, %s165
      %p177 = scmp.eq.s32.totalorder %s29, 1
      %p178 = por %p176, %p177
      %p180 = scmp.ne.s32.totalorder %s165, %s179
      %p181 = scmp.eq.s32.totalorder %s29, 0
      %p182 = por %p180, %p181
      %s183 = ssub.s32 %s30, %s42
      %s184 = ssub.s32 %s31, %s38
      %s185 = sor.u32 %s183, %s184
      %p186 = scmp.eq.s32.totalorder %s185, 0
      %s188 = sadd.s32 %s187, 1
      %s189 = scalar_select %p186, %s187, %s188
      %p192 = pneg %p186
      %p193 = scmp.eq.s32.totalorder %s23, 1
      %p194 = por %p192, %p193
      %p195 = scmp.ne.s32.totalorder %s187, %s190
      %p196 = scmp.eq.s32.totalorder %s23, 0
      %p197 = por %p195, %p196
      %p198 = scmp.ne.s32.totalorder %s187, %s190
      %p199 = scmp.eq.s32.totalorder %s28, 1
      %p200 = por %p198, %p199
      %p201 = scmp.ne.s32.totalorder %s190, %s191
      %p202 = scmp.eq.s32.totalorder %s28, 0
      %p203 = por %p201, %p202
      %p204 = scmp.ne.s32.totalorder %s190, %s191
      %p205 = scmp.eq.s32.totalorder %s29, 1
      %p206 = por %p204, %p205
      %p208 = scmp.ne.s32.totalorder %s191, %s207
      %p209 = scmp.eq.s32.totalorder %s29, 0
      %p210 = por %p208, %p209
      %p211 = scmp.le.s32.totalorder 1, %s23
      %p212 = scmp.lt.s32.totalorder %s23, 3
      %p213 = pnand %p211, %p212
      %p214 = pneg %p213
      // Predicated region
      $region9: #{utnet_attn_forward.1} parent=5 // pred_check
        _
      $region10: #{utnet_attn_forward.1} parent=5 // pred_check_branch
        %216 = sbr.rel (%p213) target = $region12
      $region11: #{utnet_attn_forward.1} parent=5 // pred_region
        %s217 = ssub.s32 %s23, 1
        // Predicated region
        $region13: #{utnet_attn_forward.1} parent=11 // pred_check
          %p218 = pneg %p112
        $region14: #{utnet_attn_forward.1} parent=11 // pred_check_branch
          %220 = sbr.rel (%p218) target = $region16
        $region15: #{utnet_attn_forward.1} parent=11 // pred_region
          %s222 = ssub.s32 256, 256
          %223 = vsyncadd [#allocation7], %s222
          %s224 = sshll.u32 [#allocation8], 4
          %s225 = int_to_ptr.vmem [resolvable:$true] %s224
          %230 = dma.hbm_to_vmem [thread:$0]  %s2, 256, %s225, [#allocation7], 64, 64, 4
        $region16: #{utnet_attn_forward.1} parent=11 // pred_fallthru
          _
        // Predicated region
        $region17: #{utnet_attn_forward.1} parent=11 // pred_check
          %p231 = pneg %p133
        $region18: #{utnet_attn_forward.1} parent=11 // pred_check_branch
          %233 = sbr.rel (%p231) target = $region20
        $region19: #{utnet_attn_forward.1} parent=11 // pred_region
          %s235 = ssub.s32 512, 512
          %236 = vsyncadd [#allocation10], %s235
          %s237 = sshll.u32 [#allocation9], 4
          %s238 = int_to_ptr.vmem [resolvable:$true] %s237
          %243 = dma.hbm_to_vmem [thread:$0]  %s3, 512, %s238, [#allocation10], 128, 128, 8
        $region20: #{utnet_attn_forward.1} parent=11 // pred_fallthru
          _
        // Predicated region
        $region21: #{utnet_attn_forward.1} parent=11 // pred_check
          %p244 = pneg %p154
        $region22: #{utnet_attn_forward.1} parent=11 // pred_check_branch
          %246 = sbr.rel (%p244) target = $region24
        $region23: #{utnet_attn_forward.1} parent=11 // pred_region
          %s248 = ssub.s32 256, 256
          %249 = vsyncadd [#allocation10], %s248
          %s250 = sshll.u32 [#allocation11], 4
          %s251 = int_to_ptr.vmem [resolvable:$true] %s250
          %256 = dma.hbm_to_vmem [thread:$0]  %s4, 256, %s251, [#allocation10], 64, 64, 4
        $region24: #{utnet_attn_forward.1} parent=11 // pred_fallthru
          _
        // Predicated region
        $region25: #{utnet_attn_forward.1} parent=11 // pred_check
          %p257 = pneg %p175
        $region26: #{utnet_attn_forward.1} parent=11 // pred_check_branch
          %259 = sbr.rel (%p257) target = $region28
        $region27: #{utnet_attn_forward.1} parent=11 // pred_region
          %s261 = ssub.s32 512, 512
          %262 = vsyncadd [#allocation13], %s261
          %s263 = sshll.u32 [#allocation12], 4
          %s264 = int_to_ptr.vmem [resolvable:$true] %s263
          %269 = dma.hbm_to_vmem [thread:$0]  %s5, 512, %s264, [#allocation13], 128, 128, 8
        $region28: #{utnet_attn_forward.1} parent=11 // pred_fallthru
          _
      $region12: #{utnet_attn_forward.1} parent=5 // pred_fallthru
        _
      %p270 = scmp.lt.s32.totalorder %s23, 2
      // Predicated region
      $region29: #{utnet_attn_forward.1} parent=5 // pred_check
        %p271 = pneg %p270
      $region30: #{utnet_attn_forward.1} parent=5 // pred_check_branch
        %273 = sbr.rel (%p271) target = $region32
      $region31: #{utnet_attn_forward.1} parent=5 // pred_region
        // Predicated region
        $region33: #{utnet_attn_forward.1} parent=31 // pred_check
          %p274 = pneg %p57
        $region34: #{utnet_attn_forward.1} parent=31 // pred_check_branch
          %276 = sbr.rel (%p274) target = $region36
        $region35: #{utnet_attn_forward.1} parent=31 // pred_region
          %s277 = sand.u32 %s47, 1
          %s278 = scalar_lea.sflag [#allocation4], %s277
          %s279 = sand.u32 %s47, 1
          %s280 = smul.addr %s279, 4
          %s281 = scalar_lea.vmem [#allocation3], %s280
          %s282 = smul.u32 2, %s31
          %s284 = ssub.s32 64, 64
          %285 = vsyncadd %s278, %s284
          %s286 = smul.addr %s30, 2
          %s287 = sadd.s32 %s282, %s286
          %s288 = smul.addr %s287, 32
          %s289 = scalar_lea.hbm %s0, %s288
          %s291 = sshll.u32 %s281, 4
          %s292 = int_to_ptr.vmem [resolvable:$true] %s291
          %294 = dma.hbm_to_vmem [thread:$0]  %s289, 64, %s292, %s278
        $region36: #{utnet_attn_forward.1} parent=31 // pred_fallthru
          _
        // Predicated region
        $region37: #{utnet_attn_forward.1} parent=31 // pred_check
          %p295 = pneg %p85
        $region38: #{utnet_attn_forward.1} parent=31 // pred_check_branch
          %297 = sbr.rel (%p295) target = $region40
        $region39: #{utnet_attn_forward.1} parent=31 // pred_region
          %s298 = sand.u32 %s23, 1
          %s299 = scalar_lea.sflag [#allocation7], %s298
          %s300 = sand.u32 %s75, 1
          %s301 = smul.addr %s300, 32
          %s302 = scalar_lea.vmem [#allocation6], %s301
          %s303 = smul.u32 2, %s31
          %s305 = ssub.s32 512, 512
          %306 = vsyncadd %s299, %s305
          %s307 = smul.addr %s30, 8
          %s308 = sadd.s32 %s303, %s307
          %s309 = smul.addr %s308, 64
          %s310 = scalar_lea.hbm %s1, %s309
          %s311 = sshll.u32 %s302, 4
          %s312 = int_to_ptr.vmem [resolvable:$true] %s311
          %317 = dma.hbm_to_vmem [thread:$0]  %s310, 512, %s312, %s299, 128, 128, 8
        $region40: #{utnet_attn_forward.1} parent=31 // pred_fallthru
          _
      $region32: #{utnet_attn_forward.1} parent=5 // pred_fallthru
        _
      %p318 = scmp.le.s32.totalorder 1, %s23
      %p319 = scmp.lt.s32.totalorder %s23, 3
      %p320 = pnand %p318, %p319
      %p321 = pneg %p320
      // Predicated region
      $region41: #{utnet_attn_forward.1} parent=5 // pred_check
        _
      $region42: #{utnet_attn_forward.1} parent=5 // pred_check_branch
        %323 = sbr.rel (%p320) target = $region44
      $region43: #{utnet_attn_forward.1} parent=5 // pred_region
        %s324 = ssub.s32 %s23, 1
        %s325 = sand.u32 %s50, 1
        %s326 = scalar_lea.sflag [#allocation4], %s325
        %s327 = sand.u32 %s50, 1
        %s328 = smul.addr %s327, 4
        %s329 = scalar_lea.vmem [#allocation3], %s328
        // Predicated region
        $region45: #{utnet_attn_forward.1} parent=43 // pred_check
          %p330 = pneg %p63
        $region46: #{utnet_attn_forward.1} parent=43 // pred_check_branch
          %332 = sbr.rel (%p330) target = $region48
        $region47: #{utnet_attn_forward.1} parent=43 // pred_region
          %333 = dma.done %s326, 64
        $region48: #{utnet_attn_forward.1} parent=43 // pred_fallthru
          _
        %s334 = sand.u32 %s28, 1
        %s335 = scalar_lea.sflag [#allocation7], %s334
        %s336 = sand.u32 %s78, 1
        %s337 = smul.addr %s336, 32
        %s338 = scalar_lea.vmem [#allocation6], %s337
        // Predicated region
        $region49: #{utnet_attn_forward.1} parent=43 // pred_check
          %p339 = pneg %p91
        $region50: #{utnet_attn_forward.1} parent=43 // pred_check_branch
          %341 = sbr.rel (%p339) target = $region52
        $region51: #{utnet_attn_forward.1} parent=43 // pred_region
          %342 = dma.done %s335, 512
        $region52: #{utnet_attn_forward.1} parent=43 // pred_fallthru
          _
        // Predicated region
        $region53: #{utnet_attn_forward.1} parent=43 // pred_check
          %p343 = pneg %p112
        $region54: #{utnet_attn_forward.1} parent=43 // pred_check_branch
          %345 = sbr.rel (%p343) target = $region56
        $region55: #{utnet_attn_forward.1} parent=43 // pred_region
          %346 = dma.done [#allocation7], 256
        $region56: #{utnet_attn_forward.1} parent=43 // pred_fallthru
          _
        // Predicated region
        $region57: #{utnet_attn_forward.1} parent=43 // pred_check
          %p347 = pneg %p133
        $region58: #{utnet_attn_forward.1} parent=43 // pred_check_branch
          %349 = sbr.rel (%p347) target = $region60
        $region59: #{utnet_attn_forward.1} parent=43 // pred_region
          %350 = dma.done [#allocation10], 512
        $region60: #{utnet_attn_forward.1} parent=43 // pred_fallthru
          _
        // Predicated region
        $region61: #{utnet_attn_forward.1} parent=43 // pred_check
          %p351 = pneg %p154
        $region62: #{utnet_attn_forward.1} parent=43 // pred_check_branch
          %353 = sbr.rel (%p351) target = $region64
        $region63: #{utnet_attn_forward.1} parent=43 // pred_region
          %354 = dma.done [#allocation10], 256
        $region64: #{utnet_attn_forward.1} parent=43 // pred_fallthru
          _
        // Predicated region
        $region65: #{utnet_attn_forward.1} parent=43 // pred_check
          %p355 = pneg %p175
        $region66: #{utnet_attn_forward.1} parent=43 // pred_check_branch
          %357 = sbr.rel (%p355) target = $region68
        $region67: #{utnet_attn_forward.1} parent=43 // pred_region
          %358 = dma.done [#allocation13], 512
        $region68: #{utnet_attn_forward.1} parent=43 // pred_fallthru
          _
        %s359 = sand.u32 %s50, 1
        %s360 = scalar_lea.sflag [#allocation4], %s359
        %s361 = sand.u32 %s50, 1
        %s362 = smul.addr %s361, 4
        %s363 = scalar_lea.vmem [#allocation3], %s362
        %p364 = pneg %p63
        %p365 = pneg %p60
        %s366 = sand.u32 %s28, 1
        %s367 = scalar_lea.sflag [#allocation7], %s366
        %s368 = sand.u32 %s78, 1
        %s369 = smul.addr %s368, 32
        %s370 = scalar_lea.vmem [#allocation6], %s369
        %p371 = pneg %p91
        %p372 = pneg %p88
        %p373 = pneg %p112
        %p374 = pneg %p109
        %p375 = pneg %p133
        %p376 = pneg %p130
        %p377 = pneg %p154
        %p378 = pneg %p151
        %p379 = pneg %p175
        %p380 = pneg %p172
        %p381 = pneg %p203
        %p382 = pneg %p200
        %s383 = sand.u32 %s190, 1
        %s384 = scalar_lea.sflag [#allocation5], %s383
        %s385 = sand.u32 %s190, 1
        %s386 = smul.addr %s385, 32
        %s387 = scalar_lea.vmem [#allocation14], %s386
        %s388 = smul.u32 2, %s33
        %s389 = smul.u32 2, %s33
        %s390 = smul.u32 2, %s33
        %v392 = vld [vmem:[%s338] sm:$0xff]
        %v393 = vld [vmem:[%s338 + $0x8] sm:$0xff]
        %v394 = vld [vmem:[%s338 + $0x10] sm:$0xff]
        %v395 = vld [vmem:[%s338 + $0x18] sm:$0xff]
        %396 = vst [vmem:[#allocation2] sm:$0xff] %v392
        %397 = vst [vmem:[#allocation2 + $0x8] sm:$0xff] %v393
        %398 = vst [vmem:[#allocation2 + $0x10] sm:$0xff] %v394
        %399 = vst [vmem:[#allocation2 + $0x18] sm:$0xff] %v395
        %v400 = vld [vmem:[%s329] sm:$0xf]
        %v403 = vunpack.c.l.s4 1983009808
        %v404 = vunpack.c.0.s8 %v403
        %v405 = vlaneseq
        %v406 = vshrl.u32 %v405, 7
        %v407 = vsub.s32 %v404, %v406
        %v408 = vrot.slane %v400, %v407
        %410 = vst [vmem:[#allocation2 + $0x20] sm:$0x33] %v408
        %v411 = vld [vmem:[#allocation8] sm:$0xf]
        %v412 = vld [vmem:[#allocation8 + $0x4] sm:$0xf]
        %v413 = vld [vmem:[#allocation8 + $0x8] sm:$0xf]
        %v414 = vld [vmem:[#allocation8 + $0xc] sm:$0xf]
        %v415 = vld [vmem:[#allocation2] sm:$0xff]
        %v416 = vld [vmem:[#allocation2 + $0x8] sm:$0xff]
        %v417 = vld [vmem:[#allocation2 + $0x10] sm:$0xff]
        %v418 = vld [vmem:[#allocation2 + $0x18] sm:$0xff]
        %v419 = vld [vmem:[#allocation2 + $0x20] sm:$0x33]
        %v420 = vld [vmem:[#allocation9] sm:$0xff]
        %v421 = vld [vmem:[#allocation9 + $0x8] sm:$0xff]
        %v422 = vld [vmem:[#allocation9 + $0x10] sm:$0xff]
        %v423 = vld [vmem:[#allocation9 + $0x18] sm:$0xff]
        %425 = vset.pattern.permute.xlu0 0
        %426 = vperm.xlu0 %425, %v420
        %v427 = vpop.permute.xlu0 %426
        %430 = vset.pattern.permute.xlu0 0
        %431 = vperm.xlu0 %430, %v421
        %v432 = vpop.permute.xlu0 %431
        %435 = vset.pattern.permute.xlu0 0
        %436 = vperm.xlu0 %435, %v422
        %v437 = vpop.permute.xlu0 %436
        %440 = vset.pattern.permute.xlu0 0
        %441 = vperm.xlu0 %440, %v423
        %v442 = vpop.permute.xlu0 %441
        %v448 = vunpack.c.l.b16 %v411
        %v449 = vunpack.c.l.b16 %v412
        %v450 = vunpack.c.l.b16 %v413
        %v451 = vunpack.c.l.b16 %v414
        %v452 = vpack.c.b16 %v449, %v448
        %v453 = vpack.c.b16 %v451, %v450
        %v459 = vunpack.c.l.b16 %v415
        %v460 = vunpack.c.h.b16 %v415
        %v461 = vunpack.c.l.b16 %v416
        %v462 = vunpack.c.h.b16 %v416
        %v463 = vunpack.c.l.b16 %v417
        %v464 = vunpack.c.h.b16 %v417
        %v465 = vunpack.c.l.b16 %v418
        %v466 = vunpack.c.h.b16 %v418
        %v467 = vunpack.c.l.b16 %v419
        %v468 = vunpack.c.h.b16 %v419
        %v469 = vpack.c.b16 %v461, %v459
        %v470 = vpack.c.b16 %v462, %v460
        %v471 = vpack.c.b16 %v465, %v463
        %v472 = vpack.c.b16 %v466, %v464
        %v473 = vpack.c.b16 %v467, %v467
        %v474 = vpack.c.b16 %v468, %v468
        %vm479 = vcmask 293888
        %v481 = vsel %vm479, %v452, 0
        %v484 = vsel %vm479, %v453, 0
        %vm486 = vcmask 1041408
        %v488 = vsel %vm486, %v473, 0
        %v491 = vsel %vm486, %v474, 0
        %493 = vmatprep.subr.bf16.mxu0 %v470
        %494 = vmatpush1.bf16.msra.mxu0 %v469
        %495 = vmatprep.subr.bf16.mxu0 %v472
        %496 = vmatpush1.bf16.msra.mxu0 %v471
        %497 = vmatprep.subr.bf16.mxu0 %v491
        %498 = vmatpush1.bf16.msra.mxu0 %v488
        %499 = vmatprep.subr.bf16.mxu0 0
        %500 = vmatpush1.bf16.msra.mxu0 0
        %501 = vmatprep.subr.bf16.mxu0 0
        %502 = vmatpush1.bf16.msra.mxu0 0
        %503 = vmatprep.subr.bf16.mxu0 0
        %504 = vmatpush1.bf16.msra.mxu0 0
        %505 = vmatprep.subr.bf16.mxu0 0
        %506 = vmatpush1.bf16.msra.mxu0 0
        %507 = vmatprep.subr.bf16.mxu0 0
        %508 = vmatpush1.bf16.msra.mxu0 0
        %509 = vmatprep.subr.bf16.mxu0 0
        %510 = vmatpush1.bf16.msra.mxu0 0
        %511 = vmatprep.subr.bf16.mxu0 0
        %512 = vmatpush1.bf16.msra.mxu0 0
        %513 = vmatprep.subr.bf16.mxu0 0
        %514 = vmatpush1.bf16.msra.mxu0 0
        %515 = vmatprep.subr.bf16.mxu0 0
        %516 = vmatpush1.bf16.msra.mxu0 0
        %517 = vmatprep.subr.bf16.mxu0 0
        %518 = vmatpush1.bf16.msra.mxu0 0
        %519 = vmatprep.subr.bf16.mxu0 0
        %520 = vmatpush1.bf16.msra.mxu0 0
        %521 = vmatprep.subr.bf16.mxu0 0
        %522 = vmatpush1.bf16.msra.mxu0 0
        %523 = vmatprep.subr.bf16.mxu0 0
        %524 = vmatpush1.bf16.msra.mxu0 0
        %525 = vmatprep.mubr.bf16.mxu0 0
        %526 = vmatmul.mubr.bf16.gmra.mrb[0].mxu0 %v481
        %v527 = vpop.f32.mrb[0].mxu0
        %v528 = vadd.f32 %v427, %v527
        %v529 = vpop.f32.mrb[0].mxu0
        %v530 = vadd.f32 %v427, %v529
        %v531 = vpop.f32.mrb[0].mxu0
        %v532 = vadd.f32 %v432, %v531
        %v533 = vpop.f32.mrb[0].mxu0
        %v534 = vadd.f32 %v432, %v533
        %535 = vmatprep.mubr.bf16.mxu0 0
        %536 = vmatmul.mubr.bf16.gmra.mrb[0].mxu0 %v484
        %v537 = vpop.f32.mrb[0].mxu0
        %v538 = vadd.f32 %v437, %v537
        %v539 = vpop.f32.mrb[0].mxu0
        %v540 = vadd.f32 %v437, %v539
        %v541 = vpop.f32.mrb[0].mxu0
        %v542 = vadd.f32 %v442, %v541
        %v543 = vpop.f32.mrb[0].mxu0
        %v544 = vadd.f32 %v442, %v543
        %545 = vdwg.mxu0
        %v546 = vmax.f32 %v528, 0.0
        %v547 = vmax.f32 %v530, 0.0
        %v548 = vmax.f32 %v532, 0.0
        %v549 = vmax.f32 %v534, 0.0
        %v550 = vmax.f32 %v538, 0.0
        %v551 = vmax.f32 %v540, 0.0
        %v552 = vmax.f32 %v542, 0.0
        %v553 = vmax.f32 %v544, 0.0
        %v554 = vpack.c.bf16 %v548, %v546
        %v555 = vpack.c.bf16 %v549, %v547
        %v556 = vpack.c.bf16 %v552, %v550
        %v557 = vpack.c.bf16 %v553, %v551
        %v558 = vld [vmem:[#allocation11] sm:$0xf]
        %v559 = vld [vmem:[#allocation11 + $0x4] sm:$0xf]
        %v560 = vld [vmem:[#allocation11 + $0x8] sm:$0xf]
        %v561 = vld [vmem:[#allocation11 + $0xc] sm:$0xf]
        %v562 = vld [vmem:[#allocation12] sm:$0xff]
        %v563 = vld [vmem:[#allocation12 + $0x8] sm:$0xff]
        %v564 = vld [vmem:[#allocation12 + $0x10] sm:$0xff]
        %v565 = vld [vmem:[#allocation12 + $0x18] sm:$0xff]
        %567 = vset.pattern.permute.xlu0 0
        %568 = vperm.xlu0 %567, %v562
        %v569 = vpop.permute.xlu0 %568
        %572 = vset.pattern.permute.xlu0 0
        %573 = vperm.xlu0 %572, %v563
        %v574 = vpop.permute.xlu0 %573
        %577 = vset.pattern.permute.xlu0 0
        %578 = vperm.xlu0 %577, %v564
        %v579 = vpop.permute.xlu0 %578
        %582 = vset.pattern.permute.xlu0 0
        %583 = vperm.xlu0 %582, %v565
        %v584 = vpop.permute.xlu0 %583
        %v590 = vunpack.c.l.b16 %v558
        %v591 = vunpack.c.l.b16 %v559
        %v592 = vunpack.c.l.b16 %v560
        %v593 = vunpack.c.l.b16 %v561
        %v594 = vpack.c.b16 %v591, %v590
        %v595 = vpack.c.b16 %v593, %v592
        %vm596 = vcmask 261120
        %v598 = vsel %vm596, %v594, 0
        %v601 = vsel %vm596, %v595, 0
        %603 = vmatprep.subr.bf16.mxu0 %v555
        %604 = vmatpush1.bf16.msra.mxu0 %v554
        %605 = vmatprep.subr.bf16.mxu0 %v557
        %606 = vmatpush1.bf16.msra.mxu0 %v556
        %607 = vmatprep.subr.bf16.mxu0 0
        %608 = vmatpush1.bf16.msra.mxu0 0
        %609 = vmatprep.subr.bf16.mxu0 0
        %610 = vmatpush1.bf16.msra.mxu0 0
        %611 = vmatprep.subr.bf16.mxu0 0
        %612 = vmatpush1.bf16.msra.mxu0 0
        %613 = vmatprep.subr.bf16.mxu0 0
        %614 = vmatpush1.bf16.msra.mxu0 0
        %615 = vmatprep.subr.bf16.mxu0 0
        %616 = vmatpush1.bf16.msra.mxu0 0
        %617 = vmatprep.subr.bf16.mxu0 0
        %618 = vmatpush1.bf16.msra.mxu0 0
        %619 = vmatprep.subr.bf16.mxu0 0
        %620 = vmatpush1.bf16.msra.mxu0 0
        %621 = vmatprep.subr.bf16.mxu0 0
        %622 = vmatpush1.bf16.msra.mxu0 0
        %623 = vmatprep.subr.bf16.mxu0 0
        %624 = vmatpush1.bf16.msra.mxu0 0
        %625 = vmatprep.subr.bf16.mxu0 0
        %626 = vmatpush1.bf16.msra.mxu0 0
        %627 = vmatprep.subr.bf16.mxu0 0
        %628 = vmatpush1.bf16.msra.mxu0 0
        %629 = vmatprep.subr.bf16.mxu0 0
        %630 = vmatpush1.bf16.msra.mxu0 0
        %631 = vmatprep.subr.bf16.mxu0 0
        %632 = vmatpush1.bf16.msra.mxu0 0
        %633 = vmatprep.subr.bf16.mxu0 0
        %634 = vmatpush1.bf16.msra.mxu0 0
        %635 = vmatprep.mubr.bf16.mxu0 0
        %636 = vmatmul.mubr.bf16.gmra.mrb[0].mxu0 %v598
        %v637 = vpop.f32.mrb[0].mxu0
        %v638 = vadd.f32 %v569, %v637
        %v639 = vpop.f32.mrb[0].mxu0
        %v640 = vadd.f32 %v569, %v639
        %v641 = vpop.f32.mrb[0].mxu0
        %v642 = vadd.f32 %v574, %v641
        %v643 = vpop.f32.mrb[0].mxu0
        %v644 = vadd.f32 %v574, %v643
        %645 = vmatprep.mubr.bf16.mxu0 0
        %646 = vmatmul.mubr.bf16.gmra.mrb[0].mxu0 %v601
        %v647 = vpop.f32.mrb[0].mxu0
        %v648 = vadd.f32 %v579, %v647
        %v649 = vpop.f32.mrb[0].mxu0
        %v650 = vadd.f32 %v579, %v649
        %v651 = vpop.f32.mrb[0].mxu0
        %v652 = vadd.f32 %v584, %v651
        %v653 = vpop.f32.mrb[0].mxu0
        %v654 = vadd.f32 %v584, %v653
        %655 = vdwg.mxu0
        %v656 = vsub.f32 0.0, %v638
        %v657 = vsub.f32 0.0, %v640
        %v658 = vsub.f32 0.0, %v642
        %v659 = vsub.f32 0.0, %v644
        %v660 = vsub.f32 0.0, %v648
        %v661 = vsub.f32 0.0, %v650
        %v662 = vsub.f32 0.0, %v652
        %v663 = vsub.f32 0.0, %v654
        %v664 = vmul.f32 %v656, 1.442695
        %v665 = vpow.pop %v664
        %v666 = vmul.f32 %v657, 1.442695
        %v667 = vpow.pop %v666
        %v668 = vmul.f32 %v658, 1.442695
        %v669 = vpow.pop %v668
        %v670 = vmul.f32 %v659, 1.442695
        %v671 = vpow.pop %v670
        %v672 = vmul.f32 %v660, 1.442695
        %v673 = vpow.pop %v672
        %v674 = vmul.f32 %v661, 1.442695
        %v675 = vpow.pop %v674
        %v676 = vmul.f32 %v662, 1.442695
        %v677 = vpow.pop %v676
        %v678 = vmul.f32 %v663, 1.442695
        %v679 = vpow.pop %v678
        %v680 = vadd.f32 %v665, 1.0
        %v681 = vadd.f32 %v667, 1.0
        %v682 = vadd.f32 %v669, 1.0
        %v683 = vadd.f32 %v671, 1.0
        %v684 = vadd.f32 %v673, 1.0
        %v685 = vadd.f32 %v675, 1.0
        %v686 = vadd.f32 %v677, 1.0
        %v687 = vadd.f32 %v679, 1.0
        %v688 = vrcp.pop %v680
        %v689 = vrcp.pop %v681
        %v690 = vrcp.pop %v682
        %v691 = vrcp.pop %v683
        %v692 = vrcp.pop %v684
        %v693 = vrcp.pop %v685
        %v694 = vrcp.pop %v686
        %v695 = vrcp.pop %v687
        %v696 = vunpack.c.l.bf16 %v392
        %v697 = vunpack.c.h.bf16 %v392
        %v698 = vunpack.c.l.bf16 %v393
        %v699 = vunpack.c.h.bf16 %v393
        %v700 = vunpack.c.l.bf16 %v394
        %v701 = vunpack.c.h.bf16 %v394
        %v702 = vunpack.c.l.bf16 %v395
        %v703 = vunpack.c.h.bf16 %v395
        %v704 = vmul.f32 %v688, %v696
        %v705 = vmul.f32 %v689, %v697
        %v706 = vmul.f32 %v690, %v698
        %v707 = vmul.f32 %v691, %v699
        %v708 = vmul.f32 %v692, %v700
        %v709 = vmul.f32 %v693, %v701
        %v710 = vmul.f32 %v694, %v702
        %v711 = vmul.f32 %v695, %v703
        %v712 = vpack.c.bf16 %v706, %v704
        %v713 = vpack.c.bf16 %v707, %v705
        %v714 = vpack.c.bf16 %v710, %v708
        %v715 = vpack.c.bf16 %v711, %v709
        %v720 = vunpack.c.l.b16 %v712
        %v721 = vunpack.c.l.b16 %v713
        %v722 = vunpack.c.h.b16 %v712
        %v723 = vunpack.c.h.b16 %v713
        %v724 = vunpack.c.l.b16 %v714
        %v725 = vunpack.c.l.b16 %v715
        %v726 = vunpack.c.h.b16 %v714
        %v727 = vunpack.c.h.b16 %v715
        %v728 = vpack.c.b16 %v721, %v720
        %v729 = vpack.c.b16 %v723, %v722
        %v730 = vpack.c.b16 %v725, %v724
        %v731 = vpack.c.b16 %v727, %v726
        %736 = vst [vmem:[%s387] sm:$0xff] %v728
        %737 = vst [vmem:[%s387 + $0x8] sm:$0xff] %v729
        %738 = vst [vmem:[%s387 + $0x10] sm:$0xff] %v730
        %739 = vst [vmem:[%s387 + $0x18] sm:$0xff] %v731
        %s740 = sand.u32 %s190, 1
        %s741 = scalar_lea.sflag [#allocation5], %s740
        %s742 = sand.u32 %s190, 1
        %s743 = smul.addr %s742, 32
        %s744 = scalar_lea.vmem [#allocation14], %s743
        // Predicated region
        $region69: #{utnet_attn_forward.1} parent=43 // pred_check
          %p745 = pneg %p200
        $region70: #{utnet_attn_forward.1} parent=43 // pred_check_branch
          %747 = sbr.rel (%p745) target = $region72
        $region71: #{utnet_attn_forward.1} parent=43 // pred_region
          %s748 = smul.u32 2, %s33
          %s750 = ssub.s32 512, 512
          %751 = vsyncadd %s741, %s750
          %s752 = smul.addr %s32, 8
          %s753 = sadd.s32 %s748, %s752
          %s754 = smul.addr %s753, 64
          %s755 = scalar_lea.hbm %s6, %s754
          %s756 = sshll.u32 %s744, 4
          %s757 = int_to_ptr.vmem [resolvable:$true] %s756
          %762 = dma.vmem_to_hbm [thread:$0]  %s757, 512, %s755, %s741, 128, 128, 8
        $region72: #{utnet_attn_forward.1} parent=43 // pred_fallthru
          _
      $region44: #{utnet_attn_forward.1} parent=5 // pred_fallthru
        _
      %p763 = scmp.le.s32.totalorder 2, %s23
      // Predicated region
      $region73: #{utnet_attn_forward.1} parent=5 // pred_check
        %p764 = pneg %p763
      $region74: #{utnet_attn_forward.1} parent=5 // pred_check_branch
        %766 = sbr.rel (%p764) target = $region76
      $region75: #{utnet_attn_forward.1} parent=5 // pred_region
        %s767 = ssub.s32 %s23, 2
        // Predicated region
        $region77: #{utnet_attn_forward.1} parent=75 // pred_check
          %p768 = pneg %p206
        $region78: #{utnet_attn_forward.1} parent=75 // pred_check_branch
          %770 = sbr.rel (%p768) target = $region80
        $region79: #{utnet_attn_forward.1} parent=75 // pred_region
          %s771 = sand.u32 %s191, 1
          %s772 = scalar_lea.sflag [#allocation5], %s771
          %s773 = sand.u32 %s191, 1
          %s774 = smul.addr %s773, 32
          %s775 = scalar_lea.vmem [#allocation14], %s774
          %776 = dma.done %s772, 512
        $region80: #{utnet_attn_forward.1} parent=75 // pred_fallthru
          _
      $region76: #{utnet_attn_forward.1} parent=5 // pred_fallthru
        _
    $region6: #{utnet_attn_forward.1} parent=1 // loop_footer
      %s27 = sadd.s32 1, %s23
    $region7: #{utnet_attn_forward.1} parent=1 // loop_footer_branch
      %22 = sbr.rel target = $region3
    $region8: #{utnet_attn_forward.1} parent=1 // loop_exit
      _
    %777 = vsyncpa [#allocation4], 1
    %s778 = scalar_lea.sflag [#allocation4], 1
    %779 = vsyncpa %s778, 1
    %780 = vsyncpa [#allocation7], 1
    %s781 = scalar_lea.sflag [#allocation7], 1
    %782 = vsyncpa %s781, 1
    %783 = vsyncpa [#allocation10], 1
    %784 = vsyncpa [#allocation13], 1
    %785 = vsyncpa [#allocation5], 1
    %s786 = scalar_lea.sflag [#allocation5], 1
    %787 = vsyncpa %s786, 1

</llo_original>
